<compile_context>
chip_gen: v6e
topology: v6e:2x2x1
jax: 0.10.0
libtpu: 0.0.40
codegen_flags: <defaults>
</compile_context>

<pallas_src>
import functools
import math

import jax
import jax.numpy as jnp
from jax.experimental import pallas as pl
from jax.experimental.pallas import tpu as pltpu


_BN_EPS = 1e-5
_INV_SQRT2 = 1.0 / math.sqrt(2.0)
_VMEM_LIMIT = 32 * 1024 * 1024  # safe on all generations; raises v5e's 16 MiB scoped default


def _gelu(v):
    # exact GELU (PyTorch F.gelu default): 0.5*x*(1+erf(x/sqrt(2)))
    return 0.5 * v * (1.0 + jax.lax.erf(v * _INV_SQRT2))


def _bn_apply(g, s, ss, gamma, beta, inv_b):
    """Apply training-mode BatchNorm1d given per-core partial sums.

    s, ss: (nc, 1, N) partial sum / sum-of-squares over the full batch.
    """
    tot = jnp.sum(s, axis=0)        # (1, N)
    tot_sq = jnp.sum(ss, axis=0)    # (1, N)
    mean = tot * inv_b
    var = tot_sq * inv_b - mean * mean          # biased variance (E[x^2] - E[x]^2)
    scale = gamma * jax.lax.rsqrt(var + _BN_EPS)
    return (g - mean) * scale + beta


def _forward_layers(x, layers, inv_b):
    """Recompute dense+GELU layers from x.

    layers[0] = (w, b); layers[k>0] = (s, ss, gamma, beta, w, b): BN of the previous
    activation (full-batch stats) then the next dense+GELU.  Returns the last
    post-GELU, pre-BN activation.  Dropout layers are identity (eval semantics).
    """
    w, b = layers[0]
    g = _gelu(jnp.dot(x, w[...], preferred_element_type=jnp.float32) + b[...])
    for (s, ss, gamma, beta, w, b) in layers[1:]:
        h = _bn_apply(g, s[...], ss[...], gamma[...], beta[...], inv_b)
        g = _gelu(jnp.dot(h, w[...], preferred_element_type=jnp.float32) + b[...])
    return g


# ---------------------------------------------------------------------------
# Path 1: fully fused single-invocation kernel (small / mid batch, everything
# resident in VMEM: weights ~200 KB, activations ~2 KB/row).
# ---------------------------------------------------------------------------
def _ffn_fused_kernel(x_ref,
                      w1_ref, b1_ref, g1_ref, be1_ref,
                      w2_ref, b2_ref, g2_ref, be2_ref,
                      w3_ref, b3_ref, g3_ref, be3_ref,
                      w4row_ref, b4_ref,
                      o_ref):
    def batchnorm(v, gamma, beta):
        # training-mode BatchNorm1d over the (fully resident) batch.
        mean = jnp.mean(v, axis=0, keepdims=True)
        c = v - mean
        var = jnp.mean(c * c, axis=0, keepdims=True)          # biased variance
        scale = gamma * jax.lax.rsqrt(var + _BN_EPS)           # (1, N)
        return c * scale + beta

    h = _gelu(jnp.dot(x_ref[...], w1_ref[...],
                      preferred_element_type=jnp.float32) + b1_ref[...])
    h = batchnorm(h, g1_ref[...], be1_ref[...])
    # dropout1: identity (eval semantics)
    h = _gelu(jnp.dot(h, w2_ref[...],
                      preferred_element_type=jnp.float32) + b2_ref[...])
    h = batchnorm(h, g2_ref[...], be2_ref[...])
    # dropout2: identity
    h = _gelu(jnp.dot(h, w3_ref[...],
                      preferred_element_type=jnp.float32) + b3_ref[...])
    h = batchnorm(h, g3_ref[...], be3_ref[...])
    # Linear(64, 1): a 1-wide MXU matmul wastes the systolic array -> VPU mul + lane reduce.
    o_ref[...] = jnp.sum(h * w4row_ref[...], axis=-1, keepdims=True) + b4_ref[...]


def _fused_forward(x, params):
    B = x.shape[0]
    (w1, b1, g1, be1, w2, b2, g2, be2, w3, b3, g3, be3, w4, b4) = params
    w4row = jnp.reshape(w4, (1, w4.shape[0]))  # (1, 64) row for the VPU reduction
    operands = (x, w1, b1, g1, be1, w2, b2, g2, be2, w3, b3, g3, be3, w4row, b4)

    def full_spec(arr):
        nd = arr.ndim
        return pl.BlockSpec(arr.shape, lambda *_: (0,) * nd)

    return pl.pallas_call(
        _ffn_fused_kernel,
        out_shape=jax.ShapeDtypeStruct((B, 1), jnp.float32),
        in_specs=[full_spec(a) for a in operands],
        out_specs=pl.BlockSpec((B, 1), lambda *_: (0, 0)),
        compiler_params=pltpu.CompilerParams(vmem_limit_bytes=_VMEM_LIMIT),
    )(*operands)


# ---------------------------------------------------------------------------
# Path 2: batch-tiled multi-pass pipeline (large batch).
# Each pass re-reads x and recomputes earlier layers; only per-feature stats and the
# final (B, 1) output hit HBM.  Full-batch BN statistics accumulated per core
# (leading "parallel" axis) and combined in the next pass.
# ---------------------------------------------------------------------------
def _stats_pass_kernel(inv_b, total_b, padded_b, tile_b, n_per_core, depth, *refs):
    x_ref = refs[0]
    n_in = 2 + 6 * (depth - 1)
    layer_args = refs[1:1 + n_in]
    s_out = refs[1 + n_in]
    ss_out = refs[2 + n_in]

    layers = [(layer_args[0], layer_args[1])]
    idx = 2
    for _ in range(depth - 1):
        layers.append(tuple(layer_args[idx:idx + 6]))
        idx += 6

    g = _forward_layers(x_ref[...], layers, inv_b)

    if total_b != padded_b:
        # mask padded batch rows out of the statistics
        c = pl.program_id(0)
        i = pl.program_id(1)
        row0 = (c * n_per_core + i) * tile_b
        ridx = row0 + jax.lax.broadcasted_iota(jnp.int32, (tile_b, 1), 0)
        g_m = jnp.where(ridx < total_b, g, 0.0)
    else:
        g_m = g

    @pl.when(pl.program_id(1) == 0)
    def _():
        s_out[...] = jnp.zeros_like(s_out)
        ss_out[...] = jnp.zeros_like(ss_out)

    s_out[...] += jnp.sum(g_m, axis=0, keepdims=True).reshape(s_out.shape)
    ss_out[...] += jnp.sum(g_m * g_m, axis=0, keepdims=True).reshape(ss_out.shape)


def _head_kernel(inv_b, *refs):
    x_ref = refs[0]
    args = refs[1:]
    layers = [(args[0], args[1])]
    idx = 2
    for _ in range(2):
        layers.append(tuple(args[idx:idx + 6]))
        idx += 6
    g3 = _forward_layers(x_ref[...], layers, inv_b)
    s3, ss3, gamma3, beta3, w4row, b4 = args[idx:idx + 6]
    o_ref = args[idx + 6]
    h3 = _bn_apply(g3, s3[...], ss3[...], gamma3[...], beta3[...], inv_b)
    # Linear(64, 1) via VPU mul + lane reduce; (tile_b, 1) output block (no broadcast).
    o_ref[...] = jnp.sum(h3 * w4row[...], axis=-1, keepdims=True) + b4[...]


def _tiled_forward(x, params, tile_b):
    B, F = x.shape
    (w1, b1, gm1, bt1, w2, b2, gm2, bt2, w3, b3, gm3, bt3, w4, b4) = params
    n1, n2, n3 = w1.shape[1], w2.shape[1], w3.shape[1]
    w4row = jnp.reshape(w4, (1, w4.shape[0]))

    n_tiles = (B + tile_b - 1) // tile_b
    B_pad = n_tiles * tile_b
    if B_pad != B:
        x = jnp.pad(x, ((0, B_pad - B), (0, 0)))

    # Leading "parallel" core axis (v7x: 2 TensorCores); harmless serial loop on v5e/v6e.
    nc = 2 if (n_tiles % 2 == 0 and n_tiles >= 2) else 1
    n_per_core = n_tiles // nc
    inv_b = 1.0 / float(B)
    f32 = jnp.float32
    grid = (nc, n_per_core)

    def row_spec(cols):            # per-tile batch rows
        return pl.BlockSpec((tile_b, cols), lambda c, i: (c * n_per_core + i, 0))

    def const_spec(shape):         # VMEM-resident across all grid steps
        nd = len(shape)
        return pl.BlockSpec(shape, lambda c, i: (0,) * nd)

    def stats_spec(n):             # per-core resident accumulator
        return pl.BlockSpec((1, 1, n), lambda c, i: (c, 0, 0))

    def stats_shape(n):
        return jax.ShapeDtypeStruct((nc, 1, n), f32)

    cp_acc = pltpu.CompilerParams(dimension_semantics=("parallel", "arbitrary"),
                                  vmem_limit_bytes=_VMEM_LIMIT)
    cp_par = pltpu.CompilerParams(dimension_semantics=("parallel", "parallel"),
                                  vmem_limit_bytes=_VMEM_LIMIT)

    # pass 1: layer-1 dense+GELU -> per-core partial sum / sum-of-squares
    s1, ss1 = pl.pallas_call(
        functools.partial(_stats_pass_kernel, inv_b, B, B_pad, tile_b, n_per_core, 1),
        grid=grid,
        in_specs=[row_spec(F), const_spec(w1.shape), const_spec(b1.shape)],
        out_specs=[stats_spec(n1), stats_spec(n1)],
        out_shape=(stats_shape(n1), stats_shape(n1)),
        compiler_params=cp_acc,
    )(x, w1, b1)

    # pass 2: recompute layer 1 from x, BN1 (full-batch stats), dropout(id),
    #         layer-2 dense+GELU -> layer-2 stats
    s2, ss2 = pl.pallas_call(
        functools.partial(_stats_pass_kernel, inv_b, B, B_pad, tile_b, n_per_core, 2),
        grid=grid,
        in_specs=[row_spec(F), const_spec(w1.shape), const_spec(b1.shape),
                  const_spec(s1.shape), const_spec(ss1.shape),
                  const_spec(gm1.shape), const_spec(bt1.shape),
                  const_spec(w2.shape), const_spec(b2.shape)],
        out_specs=[stats_spec(n2), stats_spec(n2)],
        out_shape=(stats_shape(n2), stats_shape(n2)),
        compiler_params=cp_acc,
    )(x, w1, b1, s1, ss1, gm1, bt1, w2, b2)

    # pass 3: recompute layers 1-2, BN1/BN2, layer-3 dense+GELU -> layer-3 stats
    s3, ss3 = pl.pallas_call(
        functools.partial(_stats_pass_kernel, inv_b, B, B_pad, tile_b, n_per_core, 3),
        grid=grid,
        in_specs=[row_spec(F), const_spec(w1.shape), const_spec(b1.shape),
                  const_spec(s1.shape), const_spec(ss1.shape),
                  const_spec(gm1.shape), const_spec(bt1.shape),
                  const_spec(w2.shape), const_spec(b2.shape),
                  const_spec(s2.shape), const_spec(ss2.shape),
                  const_spec(gm2.shape), const_spec(bt2.shape),
                  const_spec(w3.shape), const_spec(b3.shape)],
        out_specs=[stats_spec(n3), stats_spec(n3)],
        out_shape=(stats_shape(n3), stats_shape(n3)),
        compiler_params=cp_acc,
    )(x, w1, b1, s1, ss1, gm1, bt1, w2, b2, s2, ss2, gm2, bt2, w3, b3)

    # pass 4: recompute layers 1-3, BN3, output head -> (B_pad, 1); fully parallel per tile
    out_pad = pl.pallas_call(
        functools.partial(_head_kernel, inv_b),
        grid=grid,
        in_specs=[row_spec(F), const_spec(w1.shape), const_spec(b1.shape),
                  const_spec(s1.shape), const_spec(ss1.shape),
                  const_spec(gm1.shape), const_spec(bt1.shape),
                  const_spec(w2.shape), const_spec(b2.shape),
                  const_spec(s2.shape), const_spec(ss2.shape),
                  const_spec(gm2.shape), const_spec(bt2.shape),
                  const_spec(w3.shape), const_spec(b3.shape),
                  const_spec(s3.shape), const_spec(ss3.shape),
                  const_spec(gm3.shape), const_spec(bt3.shape),
                  const_spec(w4row.shape), const_spec(b4.shape)],
        out_specs=pl.BlockSpec((tile_b, 1), lambda c, i: (c * n_per_core + i, 0)),
        out_shape=jax.ShapeDtypeStruct((B_pad, 1), f32),
        compiler_params=cp_par,
    )(x, w1, b1, s1, ss1, gm1, bt1, w2, b2, s2, ss2, gm2, bt2, w3, b3,
      s3, ss3, gm3, bt3, w4row, b4)

    return out_pad[:B]


# ---------------------------------------------------------------------------
# Public forward
# ---------------------------------------------------------------------------
def ffn_forward(x, params, tile_b=2048, fused_max_rows=4096):
    """FFNModel forward. x: (B, n_features) float32 -> (B, 1) float32.

    Batches up to `fused_max_rows` use the single fused kernel (x read once).
    Larger batches use the 4-pass recompute-from-x pipeline with full-batch
    BatchNorm statistics (padded + masked if B is not a multiple of tile_b).
    """
    B = x.shape[0]
    assert tile_b % 8 == 0 and tile_b >= 8, "tile_b must be a positive multiple of 8"
    if B <= fused_max_rows:
        return _fused_forward(x, params)
    return _tiled_forward(x, params, tile_b)


# ---------------------------------------------------------------------------
# Deterministic parameter initialization (PyTorch-style shapes/ranges).
# ---------------------------------------------------------------------------
def init_params(key, n_features):
    dims = [(n_features, 256), (256, 128), (128, 64), (64, 1)]
    params = []
    keys = jax.random.split(key, 2 * len(dims))
    for i, (fan_in, fan_out) in enumerate(dims):
        bound = 1.0 / math.sqrt(fan_in)
        w = jax.random.uniform(keys[2 * i], (fan_in, fan_out),
                               minval=-bound, maxval=bound, dtype=jnp.float32)
        b = jax.random.uniform(keys[2 * i + 1], (1, fan_out),
                               minval=-bound, maxval=bound, dtype=jnp.float32)
        params.append(w)
        params.append(b)
        if i < 3:  # BatchNorm gamma/beta for the three hidden layers
            params.append(jnp.ones((1, fan_out), jnp.float32))   # gamma
            params.append(jnp.zeros((1, fan_out), jnp.float32))  # beta
    return tuple(params)


# Pure-JAX reference (same math) for a sanity check.
def ffn_reference(x, params):
    (w1, b1, g1, be1, w2, b2, g2, be2, w3, b3, g3, be3, w4, b4) = params

    def gelu(v):
        return 0.5 * v * (1.0 + jax.lax.erf(v / jnp.sqrt(2.0)))

    def bn(v, g, b):
        m = jnp.mean(v, axis=0, keepdims=True)
        var = jnp.mean((v - m) ** 2, axis=0, keepdims=True)
        return (v - m) * jax.lax.rsqrt(var + _BN_EPS) * g + b

    h = bn(gelu(x @ w1 + b1), g1, be1)
    h = bn(gelu(h @ w2 + b2), g2, be2)
    h = bn(gelu(h @ w3 + b3), g3, be3)
    return h @ w4 + b4


if __name__ == "__main__":
    key = jax.random.PRNGKey(0)
    kp, k1, k2, k3 = jax.random.split(key, 4)

    N_FEATURES = 32
    params = init_params(kp, N_FEATURES)

    # small batch -> fully fused single-call path
    x_small = jax.random.normal(k1, (8, N_FEATURES), dtype=jnp.float32)
    out_small = jax.block_until_ready(ffn_forward(x_small, params))
    ref_small = ffn_reference(x_small, params)
    assert out_small.shape == (8, 1), out_small.shape
    assert jnp.allclose(out_small, ref_small, atol=1e-3, rtol=1e-3)

    # larger batch, tile-divisible -> 4-pass recompute pipeline (2-way core split)
    x_mid = jax.random.normal(k2, (256, N_FEATURES), dtype=jnp.float32)
    out_mid = jax.block_until_ready(
        ffn_forward(x_mid, params, tile_b=64, fused_max_rows=0))
    ref_mid = ffn_reference(x_mid, params)
    assert out_mid.shape == (256, 1), out_mid.shape
    assert jnp.allclose(out_mid, ref_mid, atol=1e-3, rtol=1e-3)

    # ragged batch -> padded tiles, padded rows masked out of BN statistics
    x_big = jax.random.normal(k3, (250, N_FEATURES), dtype=jnp.float32)
    out_big = jax.block_until_ready(
        ffn_forward(x_big, params, tile_b=64, fused_max_rows=0))
    ref_big = ffn_reference(x_big, params)
    assert out_big.shape == (250, 1), out_big.shape
    assert jnp.allclose(out_big, ref_big, atol=1e-3, rtol=1e-3)

    print("KERNEL_OK")
</pallas_src>

<mosaic_0001>
module attributes {stable_mosaic.version = 11 : i64} {
  func.func @_ffn_fused_kernel(%arg0: memref<8x32xf32, #tpu.memory_space<vmem>>, %arg1: memref<32x256xf32, #tpu.memory_space<vmem>>, %arg2: memref<1x256xf32, #tpu.memory_space<vmem>>, %arg3: memref<1x256xf32, #tpu.memory_space<vmem>>, %arg4: memref<1x256xf32, #tpu.memory_space<vmem>>, %arg5: memref<256x128xf32, #tpu.memory_space<vmem>>, %arg6: memref<1x128xf32, #tpu.memory_space<vmem>>, %arg7: memref<1x128xf32, #tpu.memory_space<vmem>>, %arg8: memref<1x128xf32, #tpu.memory_space<vmem>>, %arg9: memref<128x64xf32, #tpu.memory_space<vmem>>, %arg10: memref<1x64xf32, #tpu.memory_space<vmem>>, %arg11: memref<1x64xf32, #tpu.memory_space<vmem>>, %arg12: memref<1x64xf32, #tpu.memory_space<vmem>>, %arg13: memref<1x64xf32, #tpu.memory_space<vmem>>, %arg14: memref<1x1xf32, #tpu.memory_space<vmem>>, %arg15: memref<8x1xf32, #tpu.memory_space<vmem>>) attributes {dimension_semantics = [], scalar_prefetch = 0 : i64, scratch_operands = 0 : i64, tpu.core_type = #tpu.core_type<tc>} {
    %c0 = arith.constant 0 : index
    %c0_0 = arith.constant 0 : index
    %0 = vector.load %arg0[%c0, %c0_0] : memref<8x32xf32, #tpu.memory_space<vmem>>, vector<8x32xf32>
    %c0_1 = arith.constant 0 : index
    %c0_2 = arith.constant 0 : index
    %1 = vector.load %arg1[%c0_1, %c0_2] : memref<32x256xf32, #tpu.memory_space<vmem>>, vector<32x256xf32>
    %cst = arith.constant dense<0.000000e+00> : vector<8x256xf32>
    %2 = tpu.matmul %0, %1, %cst {dimension_numbers = #tpu.dot_dimension_numbers<[1], [0], [0], [1], [0, 0, 1, 1], [], []>} : vector<8x32xf32>, vector<32x256xf32>, vector<8x256xf32> -> vector<8x256xf32>
    %c0_3 = arith.constant 0 : index
    %c0_4 = arith.constant 0 : index
    %3 = vector.load %arg2[%c0_3, %c0_4] : memref<1x256xf32, #tpu.memory_space<vmem>>, vector<1x256xf32>
    %4 = vector.broadcast %3 : vector<1x256xf32> to vector<8x256xf32>
    %5 = arith.addf %2, %4 : vector<8x256xf32>
    %cst_5 = arith.constant 5.000000e-01 : f32
    %6 = vector.broadcast %cst_5 : f32 to vector<8x256xf32>
    %7 = arith.mulf %6, %5 : vector<8x256xf32>
    %cst_6 = arith.constant 0.707106769 : f32
    %8 = vector.broadcast %cst_6 : f32 to vector<8x256xf32>
    %9 = arith.mulf %5, %8 : vector<8x256xf32>
    %10 = math.erf %9 : vector<8x256xf32>
    %cst_7 = arith.constant 1.000000e+00 : f32
    %11 = vector.broadcast %cst_7 : f32 to vector<8x256xf32>
    %12 = arith.addf %11, %10 : vector<8x256xf32>
    %13 = arith.mulf %7, %12 : vector<8x256xf32>
    %c0_8 = arith.constant 0 : index
    %c0_9 = arith.constant 0 : index
    %14 = vector.load %arg3[%c0_8, %c0_9] : memref<1x256xf32, #tpu.memory_space<vmem>>, vector<1x256xf32>
    %c0_10 = arith.constant 0 : index
    %c0_11 = arith.constant 0 : index
    %15 = vector.load %arg4[%c0_10, %c0_11] : memref<1x256xf32, #tpu.memory_space<vmem>>, vector<1x256xf32>
    %cst_12 = arith.constant dense<0.000000e+00> : vector<256xf32>
    %16 = vector.multi_reduction <add>, %13, %cst_12 [0] : vector<8x256xf32> to vector<256xf32>
    %17 = vector.shape_cast %16 : vector<256xf32> to vector<1x256xf32>
    %cst_13 = arith.constant 8.000000e+00 : f32
    %18 = vector.broadcast %cst_13 : f32 to vector<1x256xf32>
    %19 = arith.divf %17, %18 : vector<1x256xf32>
    %20 = vector.broadcast %19 : vector<1x256xf32> to vector<8x256xf32>
    %21 = arith.subf %13, %20 : vector<8x256xf32>
    %22 = arith.mulf %21, %21 : vector<8x256xf32>
    %cst_14 = arith.constant dense<0.000000e+00> : vector<256xf32>
    %23 = vector.multi_reduction <add>, %22, %cst_14 [0] : vector<8x256xf32> to vector<256xf32>
    %24 = vector.shape_cast %23 : vector<256xf32> to vector<1x256xf32>
    %cst_15 = arith.constant 8.000000e+00 : f32
    %25 = vector.broadcast %cst_15 : f32 to vector<1x256xf32>
    %26 = arith.divf %24, %25 : vector<1x256xf32>
    %cst_16 = arith.constant 9.99999974E-6 : f32
    %27 = vector.broadcast %cst_16 : f32 to vector<1x256xf32>
    %28 = arith.addf %26, %27 : vector<1x256xf32>
    %29 = math.rsqrt %28 : vector<1x256xf32>
    %30 = arith.mulf %14, %29 : vector<1x256xf32>
    %31 = vector.broadcast %30 : vector<1x256xf32> to vector<8x256xf32>
    %32 = arith.mulf %21, %31 : vector<8x256xf32>
    %33 = vector.broadcast %15 : vector<1x256xf32> to vector<8x256xf32>
    %34 = arith.addf %32, %33 : vector<8x256xf32>
    %c0_17 = arith.constant 0 : index
    %c0_18 = arith.constant 0 : index
    %35 = vector.load %arg5[%c0_17, %c0_18] : memref<256x128xf32, #tpu.memory_space<vmem>>, vector<256x128xf32>
    %cst_19 = arith.constant dense<0.000000e+00> : vector<8x128xf32>
    %36 = tpu.matmul %34, %35, %cst_19 {dimension_numbers = #tpu.dot_dimension_numbers<[1], [0], [0], [1], [0, 0, 1, 1], [], []>} : vector<8x256xf32>, vector<256x128xf32>, vector<8x128xf32> -> vector<8x128xf32>
    %c0_20 = arith.constant 0 : index
    %c0_21 = arith.constant 0 : index
    %37 = vector.load %arg6[%c0_20, %c0_21] : memref<1x128xf32, #tpu.memory_space<vmem>>, vector<1x128xf32>
    %38 = vector.broadcast %37 : vector<1x128xf32> to vector<8x128xf32>
    %39 = arith.addf %36, %38 : vector<8x128xf32>
    %cst_22 = arith.constant 5.000000e-01 : f32
    %40 = vector.broadcast %cst_22 : f32 to vector<8x128xf32>
    %41 = arith.mulf %40, %39 : vector<8x128xf32>
    %cst_23 = arith.constant 0.707106769 : f32
    %42 = vector.broadcast %cst_23 : f32 to vector<8x128xf32>
    %43 = arith.mulf %39, %42 : vector<8x128xf32>
    %44 = math.erf %43 : vector<8x128xf32>
    %cst_24 = arith.constant 1.000000e+00 : f32
    %45 = vector.broadcast %cst_24 : f32 to vector<8x128xf32>
    %46 = arith.addf %45, %44 : vector<8x128xf32>
    %47 = arith.mulf %41, %46 : vector<8x128xf32>
    %c0_25 = arith.constant 0 : index
    %c0_26 = arith.constant 0 : index
    %48 = vector.load %arg7[%c0_25, %c0_26] : memref<1x128xf32, #tpu.memory_space<vmem>>, vector<1x128xf32>
    %c0_27 = arith.constant 0 : index
    %c0_28 = arith.constant 0 : index
    %49 = vector.load %arg8[%c0_27, %c0_28] : memref<1x128xf32, #tpu.memory_space<vmem>>, vector<1x128xf32>
    %cst_29 = arith.constant dense<0.000000e+00> : vector<128xf32>
    %50 = vector.multi_reduction <add>, %47, %cst_29 [0] : vector<8x128xf32> to vector<128xf32>
    %51 = vector.shape_cast %50 : vector<128xf32> to vector<1x128xf32>
    %cst_30 = arith.constant 8.000000e+00 : f32
    %52 = vector.broadcast %cst_30 : f32 to vector<1x128xf32>
    %53 = arith.divf %51, %52 : vector<1x128xf32>
    %54 = vector.broadcast %53 : vector<1x128xf32> to vector<8x128xf32>
    %55 = arith.subf %47, %54 : vector<8x128xf32>
    %56 = arith.mulf %55, %55 : vector<8x128xf32>
    %cst_31 = arith.constant dense<0.000000e+00> : vector<128xf32>
    %57 = vector.multi_reduction <add>, %56, %cst_31 [0] : vector<8x128xf32> to vector<128xf32>
    %58 = vector.shape_cast %57 : vector<128xf32> to vector<1x128xf32>
    %cst_32 = arith.constant 8.000000e+00 : f32
    %59 = vector.broadcast %cst_32 : f32 to vector<1x128xf32>
    %60 = arith.divf %58, %59 : vector<1x128xf32>
    %cst_33 = arith.constant 9.99999974E-6 : f32
    %61 = vector.broadcast %cst_33 : f32 to vector<1x128xf32>
    %62 = arith.addf %60, %61 : vector<1x128xf32>
    %63 = math.rsqrt %62 : vector<1x128xf32>
    %64 = arith.mulf %48, %63 : vector<1x128xf32>
    %65 = vector.broadcast %64 : vector<1x128xf32> to vector<8x128xf32>
    %66 = arith.mulf %55, %65 : vector<8x128xf32>
    %67 = vector.broadcast %49 : vector<1x128xf32> to vector<8x128xf32>
    %68 = arith.addf %66, %67 : vector<8x128xf32>
    %c0_34 = arith.constant 0 : index
    %c0_35 = arith.constant 0 : index
    %69 = vector.load %arg9[%c0_34, %c0_35] : memref<128x64xf32, #tpu.memory_space<vmem>>, vector<128x64xf32>
    %cst_36 = arith.constant dense<0.000000e+00> : vector<8x64xf32>
    %70 = tpu.matmul %68, %69, %cst_36 {dimension_numbers = #tpu.dot_dimension_numbers<[1], [0], [0], [1], [0, 0, 1, 1], [], []>} : vector<8x128xf32>, vector<128x64xf32>, vector<8x64xf32> -> vector<8x64xf32>
    %c0_37 = arith.constant 0 : index
    %c0_38 = arith.constant 0 : index
    %71 = vector.load %arg10[%c0_37, %c0_38] : memref<1x64xf32, #tpu.memory_space<vmem>>, vector<1x64xf32>
    %72 = vector.broadcast %71 : vector<1x64xf32> to vector<8x64xf32>
    %73 = arith.addf %70, %72 : vector<8x64xf32>
    %cst_39 = arith.constant 5.000000e-01 : f32
    %74 = vector.broadcast %cst_39 : f32 to vector<8x64xf32>
    %75 = arith.mulf %74, %73 : vector<8x64xf32>
    %cst_40 = arith.constant 0.707106769 : f32
    %76 = vector.broadcast %cst_40 : f32 to vector<8x64xf32>
    %77 = arith.mulf %73, %76 : vector<8x64xf32>
    %78 = math.erf %77 : vector<8x64xf32>
    %cst_41 = arith.constant 1.000000e+00 : f32
    %79 = vector.broadcast %cst_41 : f32 to vector<8x64xf32>
    %80 = arith.addf %79, %78 : vector<8x64xf32>
    %81 = arith.mulf %75, %80 : vector<8x64xf32>
    %c0_42 = arith.constant 0 : index
    %c0_43 = arith.constant 0 : index
    %82 = vector.load %arg11[%c0_42, %c0_43] : memref<1x64xf32, #tpu.memory_space<vmem>>, vector<1x64xf32>
    %c0_44 = arith.constant 0 : index
    %c0_45 = arith.constant 0 : index
    %83 = vector.load %arg12[%c0_44, %c0_45] : memref<1x64xf32, #tpu.memory_space<vmem>>, vector<1x64xf32>
    %cst_46 = arith.constant dense<0.000000e+00> : vector<64xf32>
    %84 = vector.multi_reduction <add>, %81, %cst_46 [0] : vector<8x64xf32> to vector<64xf32>
    %85 = vector.shape_cast %84 : vector<64xf32> to vector<1x64xf32>
    %cst_47 = arith.constant 8.000000e+00 : f32
    %86 = vector.broadcast %cst_47 : f32 to vector<1x64xf32>
    %87 = arith.divf %85, %86 : vector<1x64xf32>
    %88 = vector.broadcast %87 : vector<1x64xf32> to vector<8x64xf32>
    %89 = arith.subf %81, %88 : vector<8x64xf32>
    %90 = arith.mulf %89, %89 : vector<8x64xf32>
    %cst_48 = arith.constant dense<0.000000e+00> : vector<64xf32>
    %91 = vector.multi_reduction <add>, %90, %cst_48 [0] : vector<8x64xf32> to vector<64xf32>
    %92 = vector.shape_cast %91 : vector<64xf32> to vector<1x64xf32>
    %cst_49 = arith.constant 8.000000e+00 : f32
    %93 = vector.broadcast %cst_49 : f32 to vector<1x64xf32>
    %94 = arith.divf %92, %93 : vector<1x64xf32>
    %cst_50 = arith.constant 9.99999974E-6 : f32
    %95 = vector.broadcast %cst_50 : f32 to vector<1x64xf32>
    %96 = arith.addf %94, %95 : vector<1x64xf32>
    %97 = math.rsqrt %96 : vector<1x64xf32>
    %98 = arith.mulf %82, %97 : vector<1x64xf32>
    %99 = vector.broadcast %98 : vector<1x64xf32> to vector<8x64xf32>
    %100 = arith.mulf %89, %99 : vector<8x64xf32>
    %101 = vector.broadcast %83 : vector<1x64xf32> to vector<8x64xf32>
    %102 = arith.addf %100, %101 : vector<8x64xf32>
    %c0_51 = arith.constant 0 : index
    %c0_52 = arith.constant 0 : index
    %103 = vector.load %arg13[%c0_51, %c0_52] : memref<1x64xf32, #tpu.memory_space<vmem>>, vector<1x64xf32>
    %104 = vector.broadcast %103 : vector<1x64xf32> to vector<8x64xf32>
    %105 = arith.mulf %102, %104 : vector<8x64xf32>
    %cst_53 = arith.constant dense<0.000000e+00> : vector<8xf32>
    %106 = vector.multi_reduction <add>, %105, %cst_53 [1] : vector<8x64xf32> to vector<8xf32>
    %107 = vector.shape_cast %106 : vector<8xf32> to vector<8x1xf32>
    %c0_54 = arith.constant 0 : index
    %c0_55 = arith.constant 0 : index
    %108 = vector.load %arg14[%c0_54, %c0_55] : memref<1x1xf32, #tpu.memory_space<vmem>>, vector<1x1xf32>
    %109 = vector.broadcast %108 : vector<1x1xf32> to vector<8x1xf32>
    %110 = arith.addf %107, %109 : vector<8x1xf32>
    %c0_56 = arith.constant 0 : index
    %c0_57 = arith.constant 0 : index
    %111 = vector.load %arg15[%c0_56, %c0_57] : memref<8x1xf32, #tpu.memory_space<vmem>>, vector<8x1xf32>
    tpu.vector_store %arg15[%c0_56, %c0_57], %110 {strides = array<i32>} : memref<8x1xf32, #tpu.memory_space<vmem>>, vector<8x1xf32>,
    return
  }
}

</mosaic_0001>

<llo_original>
// kernel: tpu_custom_call.1
$region0: #{tpu_custom_call.1}
  #allocation0 [shape = 'u32[]', space=smem, size = 0x4, offset = 0x4, fixed_abs, tag = 'smem constant byte address 0x4 - core index']
  #allocation1 [shape = 'u32[144,128]{1,0:T(1,128)}', space=vmem, size = 0x12000, scoped, tag = 'internal scratch']
  #allocation2 [shape = 'f32[1,1]{1,0:T(1,128)S(1)}', space=vmem, size = 0x200, scoped, tag = 'scoped memory for tpu_custom_call.1']
  %s0 = inlined_call_operand.vmem [shape: f32[8,32], index: 0, kind: input, shape index: {}]
  %s1 = inlined_call_operand.vmem [shape: f32[32,256], index: 1, kind: input, shape index: {}]
  %s2 = inlined_call_operand.vmem [shape: f32[1,256], index: 2, kind: input, shape index: {}]
  %s3 = inlined_call_operand.vmem [shape: f32[1,256], index: 3, kind: input, shape index: {}]
  %s4 = inlined_call_operand.vmem [shape: f32[1,256], index: 4, kind: input, shape index: {}]
  %s5 = inlined_call_operand.hbm [shape: f32[256,128], index: 5, kind: input, shape index: {}]
  %s6 = inlined_call_operand.vmem [shape: f32[1,128], index: 6, kind: input, shape index: {}]
  %s7 = inlined_call_operand.vmem [shape: f32[1,128], index: 7, kind: input, shape index: {}]
  %s8 = inlined_call_operand.vmem [shape: f32[1,128], index: 8, kind: input, shape index: {}]
  %s9 = inlined_call_operand.vmem [shape: f32[128,64], index: 9, kind: input, shape index: {}]
  %s10 = inlined_call_operand.vmem [shape: f32[1,64], index: 10, kind: input, shape index: {}]
  %s11 = inlined_call_operand.vmem [shape: f32[1,64], index: 11, kind: input, shape index: {}]
  %s12 = inlined_call_operand.vmem [shape: f32[1,64], index: 12, kind: input, shape index: {}]
  %s13 = inlined_call_operand.vmem [shape: f32[1,64], index: 13, kind: input, shape index: {}]
  %s14 = inlined_call_operand.<no memory space> [shape: f32[1,1], index: 14, kind: input, shape index: {}]
  %s15 = inlined_call_operand.vmem [shape: f32[8,1], index: 15, kind: output, shape index: {}]
  %s16 = sld [smem:[#allocation0]]
  $region74: #{tpu_custom_call.1} parent=0
    _
  %s18 = ssub.s32 1, %s16
  %s19 = scalar_select 0, %s18, %s16
  %v20 = vstv %s14
  %21 = vst [vmem:[#allocation2] sm:$0x1] %v20
  $region1: #{tpu_custom_call.1} parent=0
    #allocation3 [shape = 'u8[131072]{0}', space=vmem, size = 0x20000, scoped, tag = 'input window, operand 5, single buffered']
    #allocation4 [shape = 's32[1]{0}', space=sflag, size = 0x4, scoped, tag = 'scoped memory for tpu_custom_call.1']
    %22 = vsyncpa [#allocation4], 0
    // Predicated region
    $region2: #{tpu_custom_call.1} parent=1 // pred_check
      _
    $region3: #{tpu_custom_call.1} parent=1 // pred_check_branch
      %24 = sbr.rel (0) target = $region5
    $region4: #{tpu_custom_call.1} parent=1 // pred_region
      _
    $region5: #{tpu_custom_call.1} parent=1 // pred_fallthru
      _
    // Predicated region
    $region6: #{tpu_custom_call.1} parent=1 // pred_check
      _
    $region7: #{tpu_custom_call.1} parent=1 // pred_check_branch
      %26 = sbr.rel (0) target = $region9
    $region8: #{tpu_custom_call.1} parent=1 // pred_region
      _
    $region9: #{tpu_custom_call.1} parent=1 // pred_fallthru
      _
    // Predicated region
    $region10: #{tpu_custom_call.1} parent=1 // pred_check
      _
    $region11: #{tpu_custom_call.1} parent=1 // pred_check_branch
      %28 = sbr.rel (0) target = $region13
    $region12: #{tpu_custom_call.1} parent=1 // pred_region
      _
    $region13: #{tpu_custom_call.1} parent=1 // pred_fallthru
      _
    // Predicated region
    $region14: #{tpu_custom_call.1} parent=1 // pred_check
      _
    $region15: #{tpu_custom_call.1} parent=1 // pred_check_branch
      %30 = sbr.rel (0) target = $region17
    $region16: #{tpu_custom_call.1} parent=1 // pred_region
      _
    $region17: #{tpu_custom_call.1} parent=1 // pred_fallthru
      _
    // Predicated region
    $region18: #{tpu_custom_call.1} parent=1 // pred_check
      _
    $region19: #{tpu_custom_call.1} parent=1 // pred_check_branch
      %32 = sbr.rel (0) target = $region21
    $region20: #{tpu_custom_call.1} parent=1 // pred_region
      _
    $region21: #{tpu_custom_call.1} parent=1 // pred_fallthru
      _
    // Predicated region
    $region22: #{tpu_custom_call.1} parent=1 // pred_check
      _
    $region23: #{tpu_custom_call.1} parent=1 // pred_check_branch
      %34 = sbr.rel (0) target = $region25
    $region24: #{tpu_custom_call.1} parent=1 // pred_region
      %s36 = ssub.s32 4096, 4096
      %37 = vsyncadd [#allocation4], %s36
      %s38 = sshll.u32 [#allocation3], 4
      %s39 = int_to_ptr.vmem [resolvable:$true] %s38
      %44 = dma.hbm_to_vmem [thread:$0]  %s5, 4096, %s39, [#allocation4], 128, 128, 8
    $region25: #{tpu_custom_call.1} parent=1 // pred_fallthru
      _
    // Predicated region
    $region26: #{tpu_custom_call.1} parent=1 // pred_check
      _
    $region27: #{tpu_custom_call.1} parent=1 // pred_check_branch
      %46 = sbr.rel (0) target = $region29
    $region28: #{tpu_custom_call.1} parent=1 // pred_region
      _
    $region29: #{tpu_custom_call.1} parent=1 // pred_fallthru
      _
    // Predicated region
    $region30: #{tpu_custom_call.1} parent=1 // pred_check
      _
    $region31: #{tpu_custom_call.1} parent=1 // pred_check_branch
      %48 = sbr.rel (0) target = $region33
    $region32: #{tpu_custom_call.1} parent=1 // pred_region
      _
    $region33: #{tpu_custom_call.1} parent=1 // pred_fallthru
      _
    // Predicated region
    $region34: #{tpu_custom_call.1} parent=1 // pred_check
      _
    $region35: #{tpu_custom_call.1} parent=1 // pred_check_branch
      %50 = sbr.rel (0) target = $region37
    $region36: #{tpu_custom_call.1} parent=1 // pred_region
      _
    $region37: #{tpu_custom_call.1} parent=1 // pred_fallthru
      _
    // Predicated region
    $region38: #{tpu_custom_call.1} parent=1 // pred_check
      _
    $region39: #{tpu_custom_call.1} parent=1 // pred_check_branch
      %52 = sbr.rel (0) target = $region41
    $region40: #{tpu_custom_call.1} parent=1 // pred_region
      _
    $region41: #{tpu_custom_call.1} parent=1 // pred_fallthru
      _
    // Predicated region
    $region42: #{tpu_custom_call.1} parent=1 // pred_check
      _
    $region43: #{tpu_custom_call.1} parent=1 // pred_check_branch
      %54 = sbr.rel (0) target = $region45
    $region44: #{tpu_custom_call.1} parent=1 // pred_region
      _
    $region45: #{tpu_custom_call.1} parent=1 // pred_fallthru
      _
    // Predicated region
    $region46: #{tpu_custom_call.1} parent=1 // pred_check
      _
    $region47: #{tpu_custom_call.1} parent=1 // pred_check_branch
      %56 = sbr.rel (0) target = $region49
    $region48: #{tpu_custom_call.1} parent=1 // pred_region
      _
    $region49: #{tpu_custom_call.1} parent=1 // pred_fallthru
      _
    // Predicated region
    $region50: #{tpu_custom_call.1} parent=1 // pred_check
      _
    $region51: #{tpu_custom_call.1} parent=1 // pred_check_branch
      %58 = sbr.rel (0) target = $region53
    $region52: #{tpu_custom_call.1} parent=1 // pred_region
      _
    $region53: #{tpu_custom_call.1} parent=1 // pred_fallthru
      _
    // Predicated region
    $region54: #{tpu_custom_call.1} parent=1 // pred_check
      _
    $region55: #{tpu_custom_call.1} parent=1 // pred_check_branch
      %60 = sbr.rel (0) target = $region57
    $region56: #{tpu_custom_call.1} parent=1 // pred_region
      _
    $region57: #{tpu_custom_call.1} parent=1 // pred_fallthru
      _
    // Predicated region
    $region58: #{tpu_custom_call.1} parent=1 // pred_check
      _
    $region59: #{tpu_custom_call.1} parent=1 // pred_check_branch
      %62 = sbr.rel (0) target = $region61
    $region60: #{tpu_custom_call.1} parent=1 // pred_region
      _
    $region61: #{tpu_custom_call.1} parent=1 // pred_fallthru
      _
    // Predicated region
    $region62: #{tpu_custom_call.1} parent=1 // pred_check
      _
    $region63: #{tpu_custom_call.1} parent=1 // pred_check_branch
      %64 = sbr.rel (0) target = $region65
    $region64: #{tpu_custom_call.1} parent=1 // pred_region
      %65 = dma.done [#allocation4], 4096
    $region65: #{tpu_custom_call.1} parent=1 // pred_fallthru
      _
    %v66 = vld [vmem:[%s0] sm:$0xff]
    %v67 = vld [vmem:[%s1] sm:$0xff]
    %v68 = vld [vmem:[%s1 + $0x8] sm:$0xff]
    %v69 = vld [vmem:[%s1 + $0x10] sm:$0xff]
    %v70 = vld [vmem:[%s1 + $0x18] sm:$0xff]
    %v71 = vld [vmem:[%s1 + $0x20] sm:$0xff]
    %v72 = vld [vmem:[%s1 + $0x28] sm:$0xff]
    %v73 = vld [vmem:[%s1 + $0x30] sm:$0xff]
    %v74 = vld [vmem:[%s1 + $0x38] sm:$0xff]
    %v75 = vld [vmem:[%s2] sm:$0x3]
    %v77 = vlaneseq
    %v78 = vshrl.u32 %v77, 7
    %v79 = vsub.s32 0, %v78
    %v80 = vrot.slane %v75, %v79
    %v81 = vlaneseq
    %v82 = vshrl.u32 %v81, 7
    %v83 = vsub.s32 1, %v82
    %v84 = vrot.slane %v75, %v83
    %vm87 = vcmask 261120
    %v89 = vsel %vm87, %v66, 0
    %91 = vmatprep.subr.mxu0 0.0
    %92 = vmatpush1.msra.mxu0 0.0
    %93 = vmatprep.subr.mxu0 0.0
    %94 = vmatpush1.msra.mxu0 0.0
    %95 = vmatprep.subr.mxu0 0.0
    %96 = vmatpush1.msra.mxu0 0.0
    %97 = vmatprep.subr.mxu0 0.0
    %98 = vmatpush1.msra.mxu0 0.0
    %99 = vmatprep.subr.mxu0 0.0
    %100 = vmatpush1.msra.mxu0 0.0
    %101 = vmatprep.subr.mxu0 0.0
    %102 = vmatpush1.msra.mxu0 0.0
    %103 = vmatprep.subr.mxu0 0.0
    %104 = vmatpush1.msra.mxu0 0.0
    %105 = vmatprep.subr.mxu0 0.0
    %106 = vmatpush1.msra.mxu0 0.0
    %107 = vmatprep.subr.mxu0 0.0
    %108 = vmatpush1.msra.mxu0 0.0
    %109 = vmatprep.subr.mxu0 0.0
    %110 = vmatpush1.msra.mxu0 0.0
    %111 = vmatprep.subr.mxu0 0.0
    %112 = vmatpush1.msra.mxu0 0.0
    %113 = vmatprep.subr.mxu0 0.0
    %114 = vmatpush1.msra.mxu0 0.0
    %115 = vmatprep.subr.mxu0 %v74
    %116 = vmatpush1.msra.mxu0 %v73
    %117 = vmatprep.subr.mxu0 %v72
    %118 = vmatpush1.msra.mxu0 %v71
    %119 = vmatprep.subr.mxu0 %v70
    %120 = vmatpush1.msra.mxu0 %v69
    %121 = vmatprep.subr.mxu0 %v68
    %122 = vmatpush1.msra.mxu0 %v67
    %123 = vmatprep.subr.mxu0 0.0
    %124 = vmatpush2.msra.mxu0 0.0
    %125 = vmatprep.subr.mxu0 0.0
    %126 = vmatpush2.msra.mxu0 0.0
    %127 = vmatprep.subr.mxu0 0.0
    %128 = vmatpush2.msra.mxu0 0.0
    %129 = vmatprep.subr.mxu0 0.0
    %130 = vmatpush2.msra.mxu0 0.0
    %131 = vmatprep.subr.mxu0 0.0
    %132 = vmatpush2.msra.mxu0 0.0
    %133 = vmatprep.subr.mxu0 0.0
    %134 = vmatpush2.msra.mxu0 0.0
    %135 = vmatprep.subr.mxu0 0.0
    %136 = vmatpush2.msra.mxu0 0.0
    %137 = vmatprep.subr.mxu0 0.0
    %138 = vmatpush2.msra.mxu0 0.0
    %139 = vmatprep.subr.mxu0 0.0
    %140 = vmatpush2.msra.mxu0 0.0
    %141 = vmatprep.subr.mxu0 0.0
    %142 = vmatpush2.msra.mxu0 0.0
    %143 = vmatprep.subr.mxu0 0.0
    %144 = vmatpush2.msra.mxu0 0.0
    %145 = vmatprep.subr.mxu0 0.0
    %146 = vmatpush2.msra.mxu0 0.0
    %147 = vmatprep.subr.mxu0 0.0
    %148 = vmatpush2.msra.mxu0 0.0
    %149 = vmatprep.subr.mxu0 0.0
    %150 = vmatpush2.msra.mxu0 0.0
    %151 = vmatprep.subr.mxu0 0.0
    %152 = vmatpush2.msra.mxu0 0.0
    %153 = vmatprep.subr.mxu0 0.0
    %154 = vmatpush2.msra.mxu0 0.0
    %155 = vmatprep.mubr.f32.mxu0 0.0
    %156 = vmatmul.mubr.f32.gmra.mxu0 %v89
    %v157 = vpop.f32.mrf.mxu0
    %v158 = vadd.f32 %v80, %v157
    %v159 = vpop.f32.mrf.mxu0
    %v160 = vadd.f32 %v84, %v159
    %161 = vdwg.mxu0
    %v162 = vmul.f32 %v158, 0.5
    %v163 = vmul.f32 %v160, 0.5
    %v164 = vmul.f32 %v158, 0.70710677
    %v165 = vmul.f32 %v160, 0.70710677
    %v166 = verf.f32.pop %v164
    %v167 = verf.f32.pop %v165
    %v168 = vadd.f32 %v166, 1.0
    %v169 = vadd.f32 %v167, 1.0
    %v170 = vmul.f32 %v162, %v168
    %v171 = vmul.f32 %v163, %v169
    %v172 = vld [vmem:[%s3] sm:$0x3]
    %v173 = vld [vmem:[%s4] sm:$0x3]
    %v174 = vrot.slane %v170, 4
    %v175 = vadd.f32 %v170, %v174
    %v176 = vrot.slane %v175, 2
    %v177 = vadd.f32 %v175, %v176
    %v178 = vrot.slane %v177, 1
    %v179 = vadd.f32 %v177, %v178
    %v180 = vrot.slane %v171, 4
    %v181 = vadd.f32 %v171, %v180
    %v182 = vrot.slane %v181, 2
    %v183 = vadd.f32 %v181, %v182
    %v184 = vrot.slane %v183, 1
    %v185 = vadd.f32 %v183, %v184
    %v186 = vrcp.pop 8.0
    %v187 = vmul.f32 %v179, %v186
    %v188 = vmul.f32 %v185, %v186
    %v189 = vsub.f32 %v170, %v187
    %v190 = vsub.f32 %v171, %v188
    %v191 = vmul.f32 %v189, %v189
    %v192 = vmul.f32 %v190, %v190
    %v193 = vrot.slane %v191, 4
    %v194 = vadd.f32 %v191, %v193
    %v195 = vrot.slane %v194, 2
    %v196 = vadd.f32 %v194, %v195
    %v197 = vrot.slane %v196, 1
    %v198 = vadd.f32 %v196, %v197
    %v199 = vrot.slane %v192, 4
    %v200 = vadd.f32 %v192, %v199
    %v201 = vrot.slane %v200, 2
    %v202 = vadd.f32 %v200, %v201
    %v203 = vrot.slane %v202, 1
    %v204 = vadd.f32 %v202, %v203
    %v205 = vmul.f32 %v198, %v186
    %v206 = vmul.f32 %v204, %v186
    %v207 = vadd.f32 %v205, 1e-05
    %v208 = vadd.f32 %v206, 1e-05
    %v209 = vrsqrt.pop %v207
    %v210 = vrsqrt.pop %v208
    %v213 = vcombine.low %v209, %v210
    %v215 = vunpack.c.l.s4 1966171168
    %v216 = vunpack.c.0.s8 %v215
    %v217 = vlaneseq
    %v218 = vshrl.u32 %v217, 7
    %v219 = vsub.s32 %v216, %v218
    %v220 = vrot.slane %v213, %v219
    %v222 = vunpack.c.l.s4 1966171168
    %v223 = vunpack.c.0.s8 %v222
    %v224 = vlaneseq
    %v225 = vshrl.u32 %v224, 7
    %v226 = vsub.s32 %v223, %v225
    %v227 = vrot.slane %v220, %v226
    %v229 = vmul.f32 %v172, %v227
    %v231 = vlaneseq
    %v232 = vshrl.u32 %v231, 7
    %v233 = vsub.s32 0, %v232
    %v234 = vrot.slane %v229, %v233
    %v235 = vlaneseq
    %v236 = vshrl.u32 %v235, 7
    %v237 = vsub.s32 1, %v236
    %v238 = vrot.slane %v229, %v237
    %v241 = vmul.f32 %v189, %v234
    %v242 = vmul.f32 %v190, %v238
    %v244 = vlaneseq
    %v245 = vshrl.u32 %v244, 7
    %v246 = vsub.s32 0, %v245
    %v247 = vrot.slane %v173, %v246
    %v248 = vlaneseq
    %v249 = vshrl.u32 %v248, 7
    %v250 = vsub.s32 1, %v249
    %v251 = vrot.slane %v173, %v250
    %v254 = vadd.f32 %v241, %v247
    %v255 = vadd.f32 %v242, %v251
    %v256 = vld [vmem:[#allocation3] sm:$0xff]
    %v257 = vld [vmem:[#allocation3 + $0x8] sm:$0xff]
    %v258 = vld [vmem:[#allocation3 + $0x10] sm:$0xff]
    %v259 = vld [vmem:[#allocation3 + $0x18] sm:$0xff]
    %v260 = vld [vmem:[#allocation3 + $0x20] sm:$0xff]
    %v261 = vld [vmem:[#allocation3 + $0x28] sm:$0xff]
    %v262 = vld [vmem:[#allocation3 + $0x30] sm:$0xff]
    %v263 = vld [vmem:[#allocation3 + $0x38] sm:$0xff]
    %v264 = vld [vmem:[#allocation3 + $0x40] sm:$0xff]
    %v265 = vld [vmem:[#allocation3 + $0x48] sm:$0xff]
    %v266 = vld [vmem:[#allocation3 + $0x50] sm:$0xff]
    %v267 = vld [vmem:[#allocation3 + $0x58] sm:$0xff]
    %v268 = vld [vmem:[#allocation3 + $0x60] sm:$0xff]
    %v269 = vld [vmem:[#allocation3 + $0x68] sm:$0xff]
    %v270 = vld [vmem:[#allocation3 + $0x70] sm:$0xff]
    %v271 = vld [vmem:[#allocation3 + $0x78] sm:$0xff]
    %v272 = vld [vmem:[#allocation3 + $0x80] sm:$0xff]
    %v273 = vld [vmem:[#allocation3 + $0x88] sm:$0xff]
    %v274 = vld [vmem:[#allocation3 + $0x90] sm:$0xff]
    %v275 = vld [vmem:[#allocation3 + $0x98] sm:$0xff]
    %v276 = vld [vmem:[#allocation3 + $0xa0] sm:$0xff]
    %v277 = vld [vmem:[#allocation3 + $0xa8] sm:$0xff]
    %v278 = vld [vmem:[#allocation3 + $0xb0] sm:$0xff]
    %v279 = vld [vmem:[#allocation3 + $0xb8] sm:$0xff]
    %v280 = vld [vmem:[#allocation3 + $0xc0] sm:$0xff]
    %v281 = vld [vmem:[#allocation3 + $0xc8] sm:$0xff]
    %v282 = vld [vmem:[#allocation3 + $0xd0] sm:$0xff]
    %v283 = vld [vmem:[#allocation3 + $0xd8] sm:$0xff]
    %v284 = vld [vmem:[#allocation3 + $0xe0] sm:$0xff]
    %v285 = vld [vmem:[#allocation3 + $0xe8] sm:$0xff]
    %v286 = vld [vmem:[#allocation3 + $0xf0] sm:$0xff]
    %v287 = vld [vmem:[#allocation3 + $0xf8] sm:$0xff]
    %v288 = vld [vmem:[%s6] sm:$0x1]
    %v290 = vlaneseq
    %v291 = vshrl.u32 %v290, 7
    %v292 = vsub.s32 0, %v291
    %v293 = vrot.slane %v288, %v292
    %295 = vmatprep.subr.mxu0 0.0
    %296 = vmatpush1.msra.mxu0 %v271
    %297 = vmatprep.subr.mxu0 0.0
    %298 = vmatpush1.msra.mxu0 %v270
    %299 = vmatprep.subr.mxu0 0.0
    %300 = vmatpush1.msra.mxu0 %v269
    %301 = vmatprep.subr.mxu0 0.0
    %302 = vmatpush1.msra.mxu0 %v268
    %303 = vmatprep.subr.mxu0 0.0
    %304 = vmatpush1.msra.mxu0 %v267
    %305 = vmatprep.subr.mxu0 0.0
    %306 = vmatpush1.msra.mxu0 %v266
    %307 = vmatprep.subr.mxu0 0.0
    %308 = vmatpush1.msra.mxu0 %v265
    %309 = vmatprep.subr.mxu0 0.0
    %310 = vmatpush1.msra.mxu0 %v264
    %311 = vmatprep.subr.mxu0 0.0
    %312 = vmatpush1.msra.mxu0 %v263
    %313 = vmatprep.subr.mxu0 0.0
    %314 = vmatpush1.msra.mxu0 %v262
    %315 = vmatprep.subr.mxu0 0.0
    %316 = vmatpush1.msra.mxu0 %v261
    %317 = vmatprep.subr.mxu0 0.0
    %318 = vmatpush1.msra.mxu0 %v260
    %319 = vmatprep.subr.mxu0 0.0
    %320 = vmatpush1.msra.mxu0 %v259
    %321 = vmatprep.subr.mxu0 0.0
    %322 = vmatpush1.msra.mxu0 %v258
    %323 = vmatprep.subr.mxu0 0.0
    %324 = vmatpush1.msra.mxu0 %v257
    %325 = vmatprep.subr.mxu0 0.0
    %326 = vmatpush1.msra.mxu0 %v256
    %327 = vmatprep.subr.mxu0 0.0
    %328 = vmatpush2.msra.mxu0 %v287
    %329 = vmatprep.subr.mxu0 0.0
    %330 = vmatpush2.msra.mxu0 %v286
    %331 = vmatprep.subr.mxu0 0.0
    %332 = vmatpush2.msra.mxu0 %v285
    %333 = vmatprep.subr.mxu0 0.0
    %334 = vmatpush2.msra.mxu0 %v284
    %335 = vmatprep.subr.mxu0 0.0
    %336 = vmatpush2.msra.mxu0 %v283
    %337 = vmatprep.subr.mxu0 0.0
    %338 = vmatpush2.msra.mxu0 %v282
    %339 = vmatprep.subr.mxu0 0.0
    %340 = vmatpush2.msra.mxu0 %v281
    %341 = vmatprep.subr.mxu0 0.0
    %342 = vmatpush2.msra.mxu0 %v280
    %343 = vmatprep.subr.mxu0 0.0
    %344 = vmatpush2.msra.mxu0 %v279
    %345 = vmatprep.subr.mxu0 0.0
    %346 = vmatpush2.msra.mxu0 %v278
    %347 = vmatprep.subr.mxu0 0.0
    %348 = vmatpush2.msra.mxu0 %v277
    %349 = vmatprep.subr.mxu0 0.0
    %350 = vmatpush2.msra.mxu0 %v276
    %351 = vmatprep.subr.mxu0 0.0
    %352 = vmatpush2.msra.mxu0 %v275
    %353 = vmatprep.subr.mxu0 0.0
    %354 = vmatpush2.msra.mxu0 %v274
    %355 = vmatprep.subr.mxu0 0.0
    %356 = vmatpush2.msra.mxu0 %v273
    %357 = vmatprep.subr.mxu0 0.0
    %358 = vmatpush2.msra.mxu0 %v272
    %359 = vmatprep.mubr.f32.mxu0 %v255
    %360 = vmatmul.mubr.f32.gmra.mxu0 %v254
    %v361 = vpop.f32.mrf.mxu0
    %v362 = vadd.f32 %v293, %v361
    %v363 = vpop.f32.mrf.mxu0
    %364 = vdwg.mxu0
    %v365 = vmul.f32 %v362, 0.5
    %v366 = vmul.f32 %v362, 0.70710677
    %v367 = verf.f32.pop %v366
    %v368 = vadd.f32 %v367, 1.0
    %v369 = vmul.f32 %v365, %v368
    %v370 = vld [vmem:[%s7] sm:$0x1]
    %v371 = vld [vmem:[%s8] sm:$0x1]
    %v372 = vrot.slane %v369, 4
    %v373 = vadd.f32 %v369, %v372
    %v374 = vrot.slane %v373, 2
    %v375 = vadd.f32 %v373, %v374
    %v376 = vrot.slane %v375, 1
    %v377 = vadd.f32 %v375, %v376
    %v378 = vmul.f32 %v377, %v186
    %v379 = vsub.f32 %v369, %v378
    %v380 = vmul.f32 %v379, %v379
    %v381 = vrot.slane %v380, 4
    %v382 = vadd.f32 %v380, %v381
    %v383 = vrot.slane %v382, 2
    %v384 = vadd.f32 %v382, %v383
    %v385 = vrot.slane %v384, 1
    %v386 = vadd.f32 %v384, %v385
    %v387 = vmul.f32 %v386, %v186
    %v388 = vadd.f32 %v387, 1e-05
    %v389 = vrsqrt.pop %v388
    %v390 = vmul.f32 %v370, %v389
    %v392 = vlaneseq
    %v393 = vshrl.u32 %v392, 7
    %v394 = vsub.s32 0, %v393
    %v395 = vrot.slane %v390, %v394
    %v397 = vmul.f32 %v379, %v395
    %v399 = vlaneseq
    %v400 = vshrl.u32 %v399, 7
    %v401 = vsub.s32 0, %v400
    %v402 = vrot.slane %v371, %v401
    %v404 = vadd.f32 %v397, %v402
    %v405 = vld [vmem:[%s9] sm:$0xff]
    %v406 = vld [vmem:[%s9 + $0x8] sm:$0xff]
    %v407 = vld [vmem:[%s9 + $0x10] sm:$0xff]
    %v408 = vld [vmem:[%s9 + $0x18] sm:$0xff]
    %v409 = vld [vmem:[%s9 + $0x20] sm:$0xff]
    %v410 = vld [vmem:[%s9 + $0x28] sm:$0xff]
    %v411 = vld [vmem:[%s9 + $0x30] sm:$0xff]
    %v412 = vld [vmem:[%s9 + $0x38] sm:$0xff]
    %v413 = vld [vmem:[%s9 + $0x40] sm:$0xff]
    %v414 = vld [vmem:[%s9 + $0x48] sm:$0xff]
    %v415 = vld [vmem:[%s9 + $0x50] sm:$0xff]
    %v416 = vld [vmem:[%s9 + $0x58] sm:$0xff]
    %v417 = vld [vmem:[%s9 + $0x60] sm:$0xff]
    %v418 = vld [vmem:[%s9 + $0x68] sm:$0xff]
    %v419 = vld [vmem:[%s9 + $0x70] sm:$0xff]
    %v420 = vld [vmem:[%s9 + $0x78] sm:$0xff]
    %v421 = vld [vmem:[%s10] sm:$0x1]
    %v423 = vlaneseq
    %v424 = vshrl.u32 %v423, 7
    %v425 = vsub.s32 0, %v424
    %v426 = vrot.slane %v421, %v425
    %428 = vmatprep.subr.mxu0 0.0
    %429 = vmatpush1.msra.mxu0 %v420
    %430 = vmatprep.subr.mxu0 0.0
    %431 = vmatpush1.msra.mxu0 %v419
    %432 = vmatprep.subr.mxu0 0.0
    %433 = vmatpush1.msra.mxu0 %v418
    %434 = vmatprep.subr.mxu0 0.0
    %435 = vmatpush1.msra.mxu0 %v417
    %436 = vmatprep.subr.mxu0 0.0
    %437 = vmatpush1.msra.mxu0 %v416
    %438 = vmatprep.subr.mxu0 0.0
    %439 = vmatpush1.msra.mxu0 %v415
    %440 = vmatprep.subr.mxu0 0.0
    %441 = vmatpush1.msra.mxu0 %v414
    %442 = vmatprep.subr.mxu0 0.0
    %443 = vmatpush1.msra.mxu0 %v413
    %444 = vmatprep.subr.mxu0 0.0
    %445 = vmatpush1.msra.mxu0 %v412
    %446 = vmatprep.subr.mxu0 0.0
    %447 = vmatpush1.msra.mxu0 %v411
    %448 = vmatprep.subr.mxu0 0.0
    %449 = vmatpush1.msra.mxu0 %v410
    %450 = vmatprep.subr.mxu0 0.0
    %451 = vmatpush1.msra.mxu0 %v409
    %452 = vmatprep.subr.mxu0 0.0
    %453 = vmatpush1.msra.mxu0 %v408
    %454 = vmatprep.subr.mxu0 0.0
    %455 = vmatpush1.msra.mxu0 %v407
    %456 = vmatprep.subr.mxu0 0.0
    %457 = vmatpush1.msra.mxu0 %v406
    %458 = vmatprep.subr.mxu0 0.0
    %459 = vmatpush1.msra.mxu0 %v405
    %460 = vmatprep.subr.mxu0 0.0
    %461 = vmatpush2.msra.mxu0 0.0
    %462 = vmatprep.subr.mxu0 0.0
    %463 = vmatpush2.msra.mxu0 0.0
    %464 = vmatprep.subr.mxu0 0.0
    %465 = vmatpush2.msra.mxu0 0.0
    %466 = vmatprep.subr.mxu0 0.0
    %467 = vmatpush2.msra.mxu0 0.0
    %468 = vmatprep.subr.mxu0 0.0
    %469 = vmatpush2.msra.mxu0 0.0
    %470 = vmatprep.subr.mxu0 0.0
    %471 = vmatpush2.msra.mxu0 0.0
    %472 = vmatprep.subr.mxu0 0.0
    %473 = vmatpush2.msra.mxu0 0.0
    %474 = vmatprep.subr.mxu0 0.0
    %475 = vmatpush2.msra.mxu0 0.0
    %476 = vmatprep.subr.mxu0 0.0
    %477 = vmatpush2.msra.mxu0 0.0
    %478 = vmatprep.subr.mxu0 0.0
    %479 = vmatpush2.msra.mxu0 0.0
    %480 = vmatprep.subr.mxu0 0.0
    %481 = vmatpush2.msra.mxu0 0.0
    %482 = vmatprep.subr.mxu0 0.0
    %483 = vmatpush2.msra.mxu0 0.0
    %484 = vmatprep.subr.mxu0 0.0
    %485 = vmatpush2.msra.mxu0 0.0
    %486 = vmatprep.subr.mxu0 0.0
    %487 = vmatpush2.msra.mxu0 0.0
    %488 = vmatprep.subr.mxu0 0.0
    %489 = vmatpush2.msra.mxu0 0.0
    %490 = vmatprep.subr.mxu0 0.0
    %491 = vmatpush2.msra.mxu0 0.0
    %492 = vmatprep.mubr.f32.mxu0 0.0
    %493 = vmatmul.mubr.f32.gmra.mxu0 %v404
    %v494 = vpop.f32.mrf.mxu0
    %v495 = vadd.f32 %v426, %v494
    %v496 = vpop.f32.mrf.mxu0
    %497 = vdwg.mxu0
    %v498 = vmul.f32 %v495, 0.5
    %v499 = vmul.f32 %v495, 0.70710677
    %v500 = verf.f32.pop %v499
    %v501 = vadd.f32 %v500, 1.0
    %v502 = vmul.f32 %v498, %v501
    %v503 = vld [vmem:[%s11] sm:$0x1]
    %v504 = vld [vmem:[%s12] sm:$0x1]
    %vm505 = vcmask 523264
    %v506 = vsel %vm505, %v502, 0.0
    %v507 = vrot.slane %v506, 4
    %v508 = vadd.f32 %v506, %v507
    %v509 = vrot.slane %v508, 2
    %v510 = vadd.f32 %v508, %v509
    %v511 = vrot.slane %v510, 1
    %v512 = vadd.f32 %v510, %v511
    %v513 = vmul.f32 %v512, %v186
    %v514 = vsub.f32 %v502, %v513
    %v515 = vmul.f32 %v514, %v514
    %v516 = vsel %vm505, %v515, 0.0
    %v517 = vrot.slane %v516, 4
    %v518 = vadd.f32 %v516, %v517
    %v519 = vrot.slane %v518, 2
    %v520 = vadd.f32 %v518, %v519
    %v521 = vrot.slane %v520, 1
    %v522 = vadd.f32 %v520, %v521
    %v523 = vmul.f32 %v522, %v186
    %v524 = vadd.f32 %v523, 1e-05
    %v525 = vrsqrt.pop %v524
    %v526 = vmul.f32 %v503, %v525
    %v528 = vlaneseq
    %v529 = vshrl.u32 %v528, 7
    %v530 = vsub.s32 0, %v529
    %v531 = vrot.slane %v526, %v530
    %v533 = vmul.f32 %v514, %v531
    %v535 = vlaneseq
    %v536 = vshrl.u32 %v535, 7
    %v537 = vsub.s32 0, %v536
    %v538 = vrot.slane %v504, %v537
    %v540 = vadd.f32 %v533, %v538
    %v541 = vld [vmem:[%s13] sm:$0x1]
    %v543 = vlaneseq
    %v544 = vshrl.u32 %v543, 7
    %v545 = vsub.s32 0, %v544
    %v546 = vrot.slane %v541, %v545
    %v548 = vmul.f32 %v540, %v546
    %v549 = vsel %vm505, %v548, 0.0
    %550 = vadd.xlane.f32.xlu0 %v549
    %v551 = vpop.xlane.xlu0 %550
    %v552 = vld [vmem:[#allocation2] sm:$0x1]
    %v554 = vlaneseq
    %v555 = vshrl.u32 %v554, 7
    %v556 = vsub.s32 0, %v555
    %v557 = vrot.slane %v552, %v556
    %v559 = vadd.f32 %v551, %v557
    %vm560 = vcmask 7168
    %561 = vst.msk [vmem:[%s15] sm:$0xff] %vm560, %v559
    // Predicated region
    $region66: #{tpu_custom_call.1} parent=1 // pred_check
      _
    $region67: #{tpu_custom_call.1} parent=1 // pred_check_branch
      %563 = sbr.rel (0) target = $region69
    $region68: #{tpu_custom_call.1} parent=1 // pred_region
      _
    $region69: #{tpu_custom_call.1} parent=1 // pred_fallthru
      _
    // Predicated region
    $region70: #{tpu_custom_call.1} parent=1 // pred_check
      _
    $region71: #{tpu_custom_call.1} parent=1 // pred_check_branch
      %565 = sbr.rel (0) target = $region73
    $region72: #{tpu_custom_call.1} parent=1 // pred_region
      _
    $region73: #{tpu_custom_call.1} parent=1 // pred_fallthru
      _
    %566 = vsyncpa [#allocation4], 1

</llo_original>
